<compile_context>
chip_gen: v5e
topology: v5e:2x2
jax: 0.10.0
libtpu: 0.0.40
codegen_flags: <defaults>
</compile_context>

<pallas_src>
import functools

import jax
import jax.numpy as jnp
from jax.experimental import pallas as pl
from jax.experimental.pallas import tpu as pltpu


def _round_up(x, m):
    return ((x + m - 1) // m) * m


def _cdiv(a, b):
    return -(-a // b)


def dqn_mlp_kernel(x_ref, w1_ref, b1_ref, w2_ref, b2_ref, w3_ref, b3_ref, o_ref):
    # x: (TB, in) f32; weights bf16 (in, out_pad); biases f32 (1, out_pad);
    # o: (TB, n_pad) f32 — lane-dense (all padded widths are multiples of 128).
    x = x_ref[...].astype(jnp.bfloat16)

    # fc1 + ReLU (bf16 MXU, f32 accumulate / bias / ReLU)
    h1 = jnp.dot(x, w1_ref[...], preferred_element_type=jnp.float32) + b1_ref[...]
    h1 = jnp.maximum(h1, 0.0).astype(jnp.bfloat16)

    # fc2 + ReLU
    h2 = jnp.dot(h1, w2_ref[...], preferred_element_type=jnp.float32) + b2_ref[...]
    h2 = jnp.maximum(h2, 0.0).astype(jnp.bfloat16)

    # fc3 (no activation), lane-dense padded output
    o_ref[...] = (
        jnp.dot(h2, w3_ref[...], preferred_element_type=jnp.float32) + b3_ref[...]
    ).astype(o_ref.dtype)


def prepare_params(params):
    """One-time conversion from PyTorch-convention params to kernel layout.

    Returns dict with:
      w1 : (in,      fc1_pad) bf16     b1 : (1, fc1_pad) f32
      w2 : (fc1_pad, fc2_pad) bf16     b2 : (1, fc2_pad) f32
      w3 : (fc2_pad, n_pad)   bf16     b3 : (1, n_pad)   f32
      n_actions : original output width (for slicing)
    All padded regions are zero, so padded lanes carry exact zeros through
    relu(0*W + 0) = 0 and contribute nothing downstream.
    """
    fc1_dims, in_dim = params["w1"].shape
    fc2_dims = params["w2"].shape[0]
    n_actions = params["w3"].shape[0]

    fc1_pad = _round_up(max(fc1_dims, 1), 128)
    fc2_pad = _round_up(max(fc2_dims, 1), 128)
    n_pad = _round_up(max(n_actions, 1), 128)

    def pad_w(w_t, rows, cols):  # w_t already (in, out)
        return (
            jnp.zeros((rows, cols), jnp.bfloat16)
            .at[: w_t.shape[0], : w_t.shape[1]]
            .set(w_t.astype(jnp.bfloat16))
        )

    def pad_b(b, cols):
        return (
            jnp.zeros((1, cols), jnp.float32)
            .at[0, : b.shape[0]]
            .set(b.astype(jnp.float32))
        )

    return {
        "w1": pad_w(params["w1"].T, in_dim, fc1_pad),
        "b1": pad_b(params["b1"], fc1_pad),
        "w2": pad_w(params["w2"].T, fc1_pad, fc2_pad),
        "b2": pad_b(params["b2"], fc2_pad),
        "w3": pad_w(params["w3"].T, fc2_pad, n_pad),
        "b3": pad_b(params["b3"], n_pad),
        "n_actions": n_actions,
    }


def _resident_spec(shape):
    """Constant-index (VMEM-resident) spec; single-buffered — the block never changes."""
    try:
        return pl.BlockSpec(shape, lambda i: (0, 0), pipeline_mode=pl.Buffered(1))
    except TypeError:  # older jax without pipeline_mode kwarg: fall back to default
        return pl.BlockSpec(shape, lambda i: (0, 0))


def _choose_batch_tile(B):
    """Adaptive batch tile: minimal dead-row padding, multiple of 16 (bf16 sublane
    packing), capped at 256 (a 128-row MXU pass already saturates v5e), and >= 2 tiles
    whenever B > 16 so v7x's second TensorCore gets work under ("parallel",)."""
    if B <= 16:
        return _round_up(max(B, 1), 8)
    n_tiles = max(2, _cdiv(B, 256))
    return min(_round_up(_cdiv(B, n_tiles), 16), 256)


@functools.partial(jax.jit, static_argnames=("n_actions",))
def _dqn_forward_impl(state, w1, b1, w2, b2, w3, b3, *, n_actions):
    B, in_dim = state.shape
    fc1_pad = w1.shape[1]
    fc2_pad = w2.shape[1]
    n_pad = w3.shape[1]

    TB = _choose_batch_tile(B)
    B_pad = _round_up(B, TB)
    if B_pad != B:
        state = jnp.pad(state, ((0, B_pad - B), (0, 0)))
    num_tiles = B_pad // TB

    # Real VMEM footprint: single-buffered resident weights/biases, double-buffered
    # streamed state/output tiles, plus in-kernel f32/bf16 intermediates. ~40% headroom.
    resident_bytes = (w1.size + w2.size + w3.size) * 2 + (b1.size + b2.size + b3.size) * 4
    stream_bytes = 2 * TB * in_dim * 4 + 2 * TB * n_pad * 4
    scratch_bytes = TB * (fc1_pad + fc2_pad) * 6 + TB * in_dim * 2
    vmem_limit = int(1.4 * (resident_bytes + stream_bytes + scratch_bytes)) + (2 << 20)
    vmem_limit = min(max(vmem_limit, 8 << 20), 64 << 20)  # cap to v7x physical VMEM

    flops = 2 * B_pad * (in_dim * fc1_pad + fc1_pad * fc2_pad + fc2_pad * n_pad)
    bytes_accessed = (
        B_pad * in_dim * 4                              # state in
        + (w1.size + w2.size + w3.size) * 2             # bf16 weights (once)
        + (b1.size + b2.size + b3.size) * 4             # f32 biases (once)
        + B_pad * n_pad * 4                             # output
    )

    out_padded = pl.pallas_call(
        dqn_mlp_kernel,
        out_shape=jax.ShapeDtypeStruct((B_pad, n_pad), jnp.float32),
        grid=(num_tiles,),
        in_specs=[
            pl.BlockSpec((TB, in_dim), lambda i: (i, 0)),   # state: tiled over batch
            _resident_spec(w1.shape), _resident_spec(b1.shape),
            _resident_spec(w2.shape), _resident_spec(b2.shape),
            _resident_spec(w3.shape), _resident_spec(b3.shape),
        ],
        out_specs=pl.BlockSpec((TB, n_pad), lambda i: (i, 0)),
        compiler_params=pltpu.CompilerParams(
            dimension_semantics=("parallel",),              # v7x megacore over batch
            vmem_limit_bytes=vmem_limit,
        ),
        cost_estimate=pl.CostEstimate(
            flops=flops, bytes_accessed=bytes_accessed, transcendentals=0
        ),
    )(state, w1, b1, w2, b2, w3, b3)

    return out_padded[:B, :n_actions]


def dqn_forward(state, prepared):
    """state: (B, input_dim) float32. prepared: output of prepare_params()."""
    return _dqn_forward_impl(
        state,
        prepared["w1"], prepared["b1"],
        prepared["w2"], prepared["b2"],
        prepared["w3"], prepared["b3"],
        n_actions=prepared["n_actions"],
    )


def init_params(key, input_dim, fc1_dims, fc2_dims, n_actions):
    """Deterministic init mimicking nn.Linear's U(-1/sqrt(fan_in), 1/sqrt(fan_in))."""
    ks = jax.random.split(key, 6)

    def linear(kw, kb, fan_in, fan_out):
        bound = 1.0 / jnp.sqrt(jnp.float32(fan_in))
        w = jax.random.uniform(kw, (fan_out, fan_in), jnp.float32, -bound, bound)
        b = jax.random.uniform(kb, (fan_out,), jnp.float32, -bound, bound)
        return w, b

    w1, b1 = linear(ks[0], ks[1], input_dim, fc1_dims)
    w2, b2 = linear(ks[2], ks[3], fc1_dims, fc2_dims)
    w3, b3 = linear(ks[4], ks[5], fc2_dims, n_actions)
    return {"w1": w1, "b1": b1, "w2": w2, "b2": b2, "w3": w3, "b3": b3}


def _reference(state, params):
    # Pure-JAX f32 reference (same math, outside Pallas).
    h = jnp.maximum(state @ params["w1"].T + params["b1"], 0.0)
    h = jnp.maximum(h @ params["w2"].T + params["b2"], 0.0)
    return h @ params["w3"].T + params["b3"]


if __name__ == "__main__":
    # Small shapes consistent with DeepQNetwork(input_dims=(16,), fc1=32, fc2=32, n_actions=4)
    input_dim, fc1_dims, fc2_dims, n_actions = 16, 32, 32, 4

    key = jax.random.PRNGKey(0)
    k_params, k_state1, k_state2 = jax.random.split(key, 3)
    params = init_params(k_params, input_dim, fc1_dims, fc2_dims, n_actions)
    prepared = prepare_params(params)  # one-time layout/dtype prep (no per-call .T)

    # Case 1: tiny batch (single tile).
    state = jax.random.normal(k_state1, (8, input_dim), jnp.float32)
    out = jax.block_until_ready(dqn_forward(state, prepared))
    ref = _reference(state, params)
    assert out.shape == (8, n_actions)
    assert jnp.allclose(out, ref, atol=5e-2, rtol=5e-2), (
        f"max abs diff {float(jnp.max(jnp.abs(out - ref)))}"
    )

    # Case 2: batch not a tile multiple -> exercises adaptive TB, padding and >1 grid step.
    state2 = jax.random.normal(k_state2, (40, input_dim), jnp.float32)
    out2 = jax.block_until_ready(dqn_forward(state2, prepared))
    ref2 = _reference(state2, params)
    assert out2.shape == (40, n_actions)
    assert jnp.allclose(out2, ref2, atol=5e-2, rtol=5e-2), (
        f"max abs diff {float(jnp.max(jnp.abs(out2 - ref2)))}"
    )

    print("KERNEL_OK")
</pallas_src>

<mosaic_0001>
module attributes {stable_mosaic.version = 11 : i64} {
  func.func @dqn_mlp_kernel(%arg0: i32, %arg1: memref<8x16xf32, #tpu.memory_space<vmem>>, %arg2: memref<16x128xbf16, #tpu.memory_space<vmem>>, %arg3: memref<1x128xf32, #tpu.memory_space<vmem>>, %arg4: memref<128x128xbf16, #tpu.memory_space<vmem>>, %arg5: memref<1x128xf32, #tpu.memory_space<vmem>>, %arg6: memref<128x128xbf16, #tpu.memory_space<vmem>>, %arg7: memref<1x128xf32, #tpu.memory_space<vmem>>, %arg8: memref<8x128xf32, #tpu.memory_space<vmem>>) attributes {dimension_semantics = [#tpu.dimension_semantics<parallel>], iteration_bounds = array<i64: 1>, scalar_prefetch = 0 : i64, scratch_operands = 0 : i64, tpu.core_type = #tpu.core_type<tc>, window_params = [{transform_indices = @transform_0, window_bounds = array<i64: 8, 16>}, {pipeline_mode = #tpu.pipeline_mode<synchronous>, transform_indices = @transform_1, window_bounds = array<i64: 16, 128>}, {pipeline_mode = #tpu.pipeline_mode<synchronous>, transform_indices = @transform_2, window_bounds = array<i64: 1, 128>}, {pipeline_mode = #tpu.pipeline_mode<synchronous>, transform_indices = @transform_3, window_bounds = array<i64: 128, 128>}, {pipeline_mode = #tpu.pipeline_mode<synchronous>, transform_indices = @transform_4, window_bounds = array<i64: 1, 128>}, {pipeline_mode = #tpu.pipeline_mode<synchronous>, transform_indices = @transform_5, window_bounds = array<i64: 128, 128>}, {pipeline_mode = #tpu.pipeline_mode<synchronous>, transform_indices = @transform_6, window_bounds = array<i64: 1, 128>}, {transform_indices = @transform_7, window_bounds = array<i64: 8, 128>}]} {
    %c0 = arith.constant 0 : index
    %c0_0 = arith.constant 0 : index
    %0 = vector.load %arg1[%c0, %c0_0] : memref<8x16xf32, #tpu.memory_space<vmem>>, vector<8x16xf32>
    %1 = arith.truncf %0 : vector<8x16xf32> to vector<8x16xbf16>
    %c0_1 = arith.constant 0 : index
    %c0_2 = arith.constant 0 : index
    %2 = vector.load %arg2[%c0_1, %c0_2] : memref<16x128xbf16, #tpu.memory_space<vmem>>, vector<16x128xbf16>
    %cst = arith.constant dense<0.000000e+00> : vector<8x128xf32>
    %3 = tpu.matmul %1, %2, %cst {dimension_numbers = #tpu.dot_dimension_numbers<[1], [0], [0], [1], [0, 0, 1, 1], [], []>} : vector<8x16xbf16>, vector<16x128xbf16>, vector<8x128xf32> -> vector<8x128xf32>
    %c0_3 = arith.constant 0 : index
    %c0_4 = arith.constant 0 : index
    %4 = vector.load %arg3[%c0_3, %c0_4] : memref<1x128xf32, #tpu.memory_space<vmem>>, vector<1x128xf32>
    %5 = vector.broadcast %4 : vector<1x128xf32> to vector<8x128xf32>
    %6 = arith.addf %3, %5 : vector<8x128xf32>
    %cst_5 = arith.constant 0.000000e+00 : f32
    %7 = vector.broadcast %cst_5 : f32 to vector<8x128xf32>
    %8 = arith.maximumf %6, %7 : vector<8x128xf32>
    %9 = arith.truncf %8 : vector<8x128xf32> to vector<8x128xbf16>
    %c0_6 = arith.constant 0 : index
    %c0_7 = arith.constant 0 : index
    %10 = vector.load %arg4[%c0_6, %c0_7] : memref<128x128xbf16, #tpu.memory_space<vmem>>, vector<128x128xbf16>
    %cst_8 = arith.constant dense<0.000000e+00> : vector<8x128xf32>
    %11 = tpu.matmul %9, %10, %cst_8 {dimension_numbers = #tpu.dot_dimension_numbers<[1], [0], [0], [1], [0, 0, 1, 1], [], []>} : vector<8x128xbf16>, vector<128x128xbf16>, vector<8x128xf32> -> vector<8x128xf32>
    %c0_9 = arith.constant 0 : index
    %c0_10 = arith.constant 0 : index
    %12 = vector.load %arg5[%c0_9, %c0_10] : memref<1x128xf32, #tpu.memory_space<vmem>>, vector<1x128xf32>
    %13 = vector.broadcast %12 : vector<1x128xf32> to vector<8x128xf32>
    %14 = arith.addf %11, %13 : vector<8x128xf32>
    %cst_11 = arith.constant 0.000000e+00 : f32
    %15 = vector.broadcast %cst_11 : f32 to vector<8x128xf32>
    %16 = arith.maximumf %14, %15 : vector<8x128xf32>
    %17 = arith.truncf %16 : vector<8x128xf32> to vector<8x128xbf16>
    %c0_12 = arith.constant 0 : index
    %c0_13 = arith.constant 0 : index
    %18 = vector.load %arg6[%c0_12, %c0_13] : memref<128x128xbf16, #tpu.memory_space<vmem>>, vector<128x128xbf16>
    %cst_14 = arith.constant dense<0.000000e+00> : vector<8x128xf32>
    %19 = tpu.matmul %17, %18, %cst_14 {dimension_numbers = #tpu.dot_dimension_numbers<[1], [0], [0], [1], [0, 0, 1, 1], [], []>} : vector<8x128xbf16>, vector<128x128xbf16>, vector<8x128xf32> -> vector<8x128xf32>
    %c0_15 = arith.constant 0 : index
    %c0_16 = arith.constant 0 : index
    %20 = vector.load %arg7[%c0_15, %c0_16] : memref<1x128xf32, #tpu.memory_space<vmem>>, vector<1x128xf32>
    %21 = vector.broadcast %20 : vector<1x128xf32> to vector<8x128xf32>
    %22 = arith.addf %19, %21 : vector<8x128xf32>
    %c0_17 = arith.constant 0 : index
    %c0_18 = arith.constant 0 : index
    %23 = vector.load %arg8[%c0_17, %c0_18] : memref<8x128xf32, #tpu.memory_space<vmem>>, vector<8x128xf32>
    tpu.vector_store %arg8[%c0_17, %c0_18], %22 {strides = array<i32>} : memref<8x128xf32, #tpu.memory_space<vmem>>, vector<8x128xf32>,
    return
  }
  func.func @transform_0(%arg0: i32) -> (i32, i32) {
    %c0_i32 = arith.constant 0 : i32
    %c0_i32_0 = arith.constant 0 : i32
    return %arg0, %c0_i32 : i32, i32
  }
  func.func @transform_1(%arg0: i32) -> (i32, i32) {
    %c0_i32 = arith.constant 0 : i32
    %c0_i32_0 = arith.constant 0 : i32
    %c0_i32_1 = arith.constant 0 : i32
    return %c0_i32, %c0_i32_0 : i32, i32
  }
  func.func @transform_2(%arg0: i32) -> (i32, i32) {
    %c0_i32 = arith.constant 0 : i32
    %c0_i32_0 = arith.constant 0 : i32
    %c0_i32_1 = arith.constant 0 : i32
    return %c0_i32, %c0_i32_0 : i32, i32
  }
  func.func @transform_3(%arg0: i32) -> (i32, i32) {
    %c0_i32 = arith.constant 0 : i32
    %c0_i32_0 = arith.constant 0 : i32
    %c0_i32_1 = arith.constant 0 : i32
    return %c0_i32, %c0_i32_0 : i32, i32
  }
  func.func @transform_4(%arg0: i32) -> (i32, i32) {
    %c0_i32 = arith.constant 0 : i32
    %c0_i32_0 = arith.constant 0 : i32
    %c0_i32_1 = arith.constant 0 : i32
    return %c0_i32, %c0_i32_0 : i32, i32
  }
  func.func @transform_5(%arg0: i32) -> (i32, i32) {
    %c0_i32 = arith.constant 0 : i32
    %c0_i32_0 = arith.constant 0 : i32
    %c0_i32_1 = arith.constant 0 : i32
    return %c0_i32, %c0_i32_0 : i32, i32
  }
  func.func @transform_6(%arg0: i32) -> (i32, i32) {
    %c0_i32 = arith.constant 0 : i32
    %c0_i32_0 = arith.constant 0 : i32
    %c0_i32_1 = arith.constant 0 : i32
    return %c0_i32, %c0_i32_0 : i32, i32
  }
  func.func @transform_7(%arg0: i32) -> (i32, i32) {
    %c0_i32 = arith.constant 0 : i32
    %c0_i32_0 = arith.constant 0 : i32
    return %arg0, %c0_i32 : i32, i32
  }
}

</mosaic_0001>

<llo_original>
// kernel: _dqn_forward_impl.1
$region0: #{_dqn_forward_impl.1}
  #allocation0 [shape = 'u32[]', space=smem, size = 0x4, offset = 0x4, fixed_abs, tag = 'smem constant byte address 0x4 - core index']
  #allocation1 [shape = 'u32[72,128]{1,0:T(1,128)}', space=vmem, size = 0x9000, scoped, tag = 'internal scratch']
  %s0 = inlined_call_operand.hbm [shape: f32[8,16], index: 0, kind: input, shape index: {}]
  %s1 = inlined_call_operand.hbm [shape: bf16[16,128], index: 1, kind: input, shape index: {}]
  %s2 = inlined_call_operand.vmem [shape: f32[1,128], index: 2, kind: input, shape index: {}]
  %s3 = inlined_call_operand.hbm [shape: bf16[128,128], index: 3, kind: input, shape index: {}]
  %s4 = inlined_call_operand.vmem [shape: f32[1,128], index: 4, kind: input, shape index: {}]
  %s5 = inlined_call_operand.hbm [shape: bf16[128,128], index: 5, kind: input, shape index: {}]
  %s6 = inlined_call_operand.vmem [shape: f32[1,128], index: 6, kind: input, shape index: {}]
  %s7 = inlined_call_operand.vmem [shape: f32[8,128], index: 7, kind: output, shape index: {}]
  %s8 = sld [smem:[#allocation0]]
  $region54: #{_dqn_forward_impl.1} parent=0
    _
  %s10 = ssub.s32 1, %s8
  %s11 = scalar_select 0, %s10, %s8
  $region1: #{_dqn_forward_impl.1} parent=0
    #allocation2 [shape = 'u8[4096]{0}', space=vmem, size = 0x1000, scoped, tag = 'input window, operand 0, single buffered']
    #allocation3 [shape = 's32[1]{0}', space=sflag, size = 0x4, scoped, tag = 'scoped memory for _dqn_forward_impl.1']
    #allocation4 [shape = 'u8[4096]{0}', space=vmem, size = 0x1000, scoped, tag = 'input window, operand 1, single buffered']
    #allocation5 [shape = 's32[1]{0}', space=sflag, size = 0x4, scoped, tag = 'scoped memory for _dqn_forward_impl.1']
    #allocation6 [shape = 'u8[32768]{0}', space=vmem, size = 0x8000, scoped, tag = 'input window, operand 3, single buffered']
    #allocation7 [shape = 'u8[32768]{0}', space=vmem, size = 0x8000, scoped, tag = 'input window, operand 5, single buffered']
    #allocation8 [shape = 's32[1]{0}', space=sflag, size = 0x4, scoped, tag = 'scoped memory for _dqn_forward_impl.1']
    %12 = vsyncpa [#allocation3], 0
    %13 = vsyncpa [#allocation5], 0
    %14 = vsyncpa [#allocation8], 0
    // Predicated region
    $region2: #{_dqn_forward_impl.1} parent=1 // pred_check
      _
    $region3: #{_dqn_forward_impl.1} parent=1 // pred_check_branch
      %16 = sbr.rel (0) target = $region5
    $region4: #{_dqn_forward_impl.1} parent=1 // pred_region
      %18 = vsyncadd [#allocation3], 0
      %s20 = sshll.u32 %s0, 4
      %s21 = int_to_ptr.hbm [resolvable:$true] %s20
      %s22 = sshll.u32 [#allocation2], 4
      %s23 = int_to_ptr.vmem [resolvable:$true] %s22
      %25 = dma.hbm_to_vmem [thread:$0]  %s21, 128, %s23, [#allocation3]
    $region5: #{_dqn_forward_impl.1} parent=1 // pred_fallthru
      _
    // Predicated region
    $region6: #{_dqn_forward_impl.1} parent=1 // pred_check
      _
    $region7: #{_dqn_forward_impl.1} parent=1 // pred_check_branch
      %27 = sbr.rel (0) target = $region9
    $region8: #{_dqn_forward_impl.1} parent=1 // pred_region
      %29 = vsyncadd [#allocation5], 0
      %s30 = sshll.u32 %s1, 4
      %s31 = int_to_ptr.hbm [resolvable:$true] %s30
      %s32 = sshll.u32 [#allocation4], 4
      %s33 = int_to_ptr.vmem [resolvable:$true] %s32
      %38 = dma.hbm_to_vmem [thread:$0]  %s31, 128, %s33, [#allocation5], 64, 64, 4
    $region9: #{_dqn_forward_impl.1} parent=1 // pred_fallthru
      _
    // Predicated region
    $region10: #{_dqn_forward_impl.1} parent=1 // pred_check
      _
    $region11: #{_dqn_forward_impl.1} parent=1 // pred_check_branch
      %40 = sbr.rel (0) target = $region13
    $region12: #{_dqn_forward_impl.1} parent=1 // pred_region
      _
    $region13: #{_dqn_forward_impl.1} parent=1 // pred_fallthru
      _
    // Predicated region
    $region14: #{_dqn_forward_impl.1} parent=1 // pred_check
      _
    $region15: #{_dqn_forward_impl.1} parent=1 // pred_check_branch
      %42 = sbr.rel (0) target = $region17
    $region16: #{_dqn_forward_impl.1} parent=1 // pred_region
      %44 = vsyncadd [#allocation5], 0
      %s45 = sshll.u32 %s3, 4
      %s46 = int_to_ptr.hbm [resolvable:$true] %s45
      %s47 = sshll.u32 [#allocation6], 4
      %s48 = int_to_ptr.vmem [resolvable:$true] %s47
      %53 = dma.hbm_to_vmem [thread:$0]  %s46, 1024, %s48, [#allocation5], 64, 64, 4
    $region17: #{_dqn_forward_impl.1} parent=1 // pred_fallthru
      _
    // Predicated region
    $region18: #{_dqn_forward_impl.1} parent=1 // pred_check
      _
    $region19: #{_dqn_forward_impl.1} parent=1 // pred_check_branch
      %55 = sbr.rel (0) target = $region21
    $region20: #{_dqn_forward_impl.1} parent=1 // pred_region
      _
    $region21: #{_dqn_forward_impl.1} parent=1 // pred_fallthru
      _
    // Predicated region
    $region22: #{_dqn_forward_impl.1} parent=1 // pred_check
      _
    $region23: #{_dqn_forward_impl.1} parent=1 // pred_check_branch
      %57 = sbr.rel (0) target = $region25
    $region24: #{_dqn_forward_impl.1} parent=1 // pred_region
      %59 = vsyncadd [#allocation8], 0
      %s60 = sshll.u32 %s5, 4
      %s61 = int_to_ptr.hbm [resolvable:$true] %s60
      %s62 = sshll.u32 [#allocation7], 4
      %s63 = int_to_ptr.vmem [resolvable:$true] %s62
      %68 = dma.hbm_to_vmem [thread:$0]  %s61, 1024, %s63, [#allocation8], 64, 64, 4
    $region25: #{_dqn_forward_impl.1} parent=1 // pred_fallthru
      _
    // Predicated region
    $region26: #{_dqn_forward_impl.1} parent=1 // pred_check
      _
    $region27: #{_dqn_forward_impl.1} parent=1 // pred_check_branch
      %70 = sbr.rel (0) target = $region29
    $region28: #{_dqn_forward_impl.1} parent=1 // pred_region
      _
    $region29: #{_dqn_forward_impl.1} parent=1 // pred_fallthru
      _
    // Predicated region
    $region30: #{_dqn_forward_impl.1} parent=1 // pred_check
      _
    $region31: #{_dqn_forward_impl.1} parent=1 // pred_check_branch
      %72 = sbr.rel (0) target = $region33
    $region32: #{_dqn_forward_impl.1} parent=1 // pred_region
      %74 = dma.done [#allocation3], 128
    $region33: #{_dqn_forward_impl.1} parent=1 // pred_fallthru
      _
    // Predicated region
    $region34: #{_dqn_forward_impl.1} parent=1 // pred_check
      _
    $region35: #{_dqn_forward_impl.1} parent=1 // pred_check_branch
      %76 = sbr.rel (0) target = $region37
    $region36: #{_dqn_forward_impl.1} parent=1 // pred_region
      %78 = dma.done [#allocation5], 128
    $region37: #{_dqn_forward_impl.1} parent=1 // pred_fallthru
      _
    // Predicated region
    $region38: #{_dqn_forward_impl.1} parent=1 // pred_check
      _
    $region39: #{_dqn_forward_impl.1} parent=1 // pred_check_branch
      %80 = sbr.rel (0) target = $region41
    $region40: #{_dqn_forward_impl.1} parent=1 // pred_region
      %82 = dma.done [#allocation5], 1024
    $region41: #{_dqn_forward_impl.1} parent=1 // pred_fallthru
      _
    // Predicated region
    $region42: #{_dqn_forward_impl.1} parent=1 // pred_check
      _
    $region43: #{_dqn_forward_impl.1} parent=1 // pred_check_branch
      %84 = sbr.rel (0) target = $region45
    $region44: #{_dqn_forward_impl.1} parent=1 // pred_region
      %86 = dma.done [#allocation8], 1024
    $region45: #{_dqn_forward_impl.1} parent=1 // pred_fallthru
      _
    %v88 = vld [vmem:[#allocation2] sm:$0xff]
    %v89 = vpack.c.bf16 %v88, %v88
    %v90 = vld [vmem:[#allocation4] sm:$0xf]
    %v91 = vld [vmem:[#allocation4 + $0x4] sm:$0xf]
    %v92 = vld [vmem:[%s2] sm:$0x1]
    %v94 = vperm.slane %v92, 0
    %v98 = vunpack.c.l.b16 %v90
    %v99 = vunpack.c.l.b16 %v91
    %v100 = vpack.c.b16 %v99, %v98
    %vm102 = vcmask 130048
    %v104 = vsel %vm102, %v89, 0
    %106 = vmatpush.bf16.msra.mxu0 0
    %107 = vmatpush.bf16.msra.mxu0 0
    %108 = vmatpush.bf16.msra.mxu0 0
    %109 = vmatpush.bf16.msra.mxu0 0
    %110 = vmatpush.bf16.msra.mxu0 0
    %111 = vmatpush.bf16.msra.mxu0 0
    %112 = vmatpush.bf16.msra.mxu0 0
    %113 = vmatpush.bf16.msra.mxu0 %v100
    %114 = vmatmul.bf16.gmra.mxu0 %v104
    %v115 = vpop.f32.mrf.mxu0
    %v116 = vadd.f32 %v94, %v115
    %v117 = vpop.f32.mrf.mxu0
    %118 = vdwg.mxu0
    %v119 = vmax.f32 %v116, 0.0
    %v120 = vpack.c.bf16 %v119, %v119
    %v121 = vld [vmem:[#allocation6] sm:$0xf]
    %v122 = vld [vmem:[#allocation6 + $0x4] sm:$0xf]
    %v123 = vld [vmem:[#allocation6 + $0x8] sm:$0xf]
    %v124 = vld [vmem:[#allocation6 + $0xc] sm:$0xf]
    %v125 = vld [vmem:[#allocation6 + $0x10] sm:$0xf]
    %v126 = vld [vmem:[#allocation6 + $0x14] sm:$0xf]
    %v127 = vld [vmem:[#allocation6 + $0x18] sm:$0xf]
    %v128 = vld [vmem:[#allocation6 + $0x1c] sm:$0xf]
    %v129 = vld [vmem:[#allocation6 + $0x20] sm:$0xf]
    %v130 = vld [vmem:[#allocation6 + $0x24] sm:$0xf]
    %v131 = vld [vmem:[#allocation6 + $0x28] sm:$0xf]
    %v132 = vld [vmem:[#allocation6 + $0x2c] sm:$0xf]
    %v133 = vld [vmem:[#allocation6 + $0x30] sm:$0xf]
    %v134 = vld [vmem:[#allocation6 + $0x34] sm:$0xf]
    %v135 = vld [vmem:[#allocation6 + $0x38] sm:$0xf]
    %v136 = vld [vmem:[#allocation6 + $0x3c] sm:$0xf]
    %v137 = vld [vmem:[%s4] sm:$0x1]
    %v139 = vperm.slane %v137, 0
    %v157 = vunpack.c.l.b16 %v121
    %v158 = vunpack.c.l.b16 %v122
    %v159 = vunpack.c.l.b16 %v123
    %v160 = vunpack.c.l.b16 %v124
    %v161 = vunpack.c.l.b16 %v125
    %v162 = vunpack.c.l.b16 %v126
    %v163 = vunpack.c.l.b16 %v127
    %v164 = vunpack.c.l.b16 %v128
    %v165 = vunpack.c.l.b16 %v129
    %v166 = vunpack.c.l.b16 %v130
    %v167 = vunpack.c.l.b16 %v131
    %v168 = vunpack.c.l.b16 %v132
    %v169 = vunpack.c.l.b16 %v133
    %v170 = vunpack.c.l.b16 %v134
    %v171 = vunpack.c.l.b16 %v135
    %v172 = vunpack.c.l.b16 %v136
    %v173 = vpack.c.b16 %v158, %v157
    %v174 = vpack.c.b16 %v160, %v159
    %v175 = vpack.c.b16 %v162, %v161
    %v176 = vpack.c.b16 %v164, %v163
    %v177 = vpack.c.b16 %v166, %v165
    %v178 = vpack.c.b16 %v168, %v167
    %v179 = vpack.c.b16 %v170, %v169
    %v180 = vpack.c.b16 %v172, %v171
    %189 = vmatpush.bf16.msra.mxu0 %v180
    %190 = vmatpush.bf16.msra.mxu0 %v179
    %191 = vmatpush.bf16.msra.mxu0 %v178
    %192 = vmatpush.bf16.msra.mxu0 %v177
    %193 = vmatpush.bf16.msra.mxu0 %v176
    %194 = vmatpush.bf16.msra.mxu0 %v175
    %195 = vmatpush.bf16.msra.mxu0 %v174
    %196 = vmatpush.bf16.msra.mxu0 %v173
    %197 = vmatmul.bf16.gmra.mxu0 %v120
    %v198 = vpop.f32.mrf.mxu0
    %v199 = vadd.f32 %v139, %v198
    %v200 = vpop.f32.mrf.mxu0
    %201 = vdwg.mxu0
    %v202 = vmax.f32 %v199, 0.0
    %v203 = vpack.c.bf16 %v202, %v202
    %v204 = vld [vmem:[#allocation7] sm:$0xf]
    %v205 = vld [vmem:[#allocation7 + $0x4] sm:$0xf]
    %v206 = vld [vmem:[#allocation7 + $0x8] sm:$0xf]
    %v207 = vld [vmem:[#allocation7 + $0xc] sm:$0xf]
    %v208 = vld [vmem:[#allocation7 + $0x10] sm:$0xf]
    %v209 = vld [vmem:[#allocation7 + $0x14] sm:$0xf]
    %v210 = vld [vmem:[#allocation7 + $0x18] sm:$0xf]
    %v211 = vld [vmem:[#allocation7 + $0x1c] sm:$0xf]
    %v212 = vld [vmem:[#allocation7 + $0x20] sm:$0xf]
    %v213 = vld [vmem:[#allocation7 + $0x24] sm:$0xf]
    %v214 = vld [vmem:[#allocation7 + $0x28] sm:$0xf]
    %v215 = vld [vmem:[#allocation7 + $0x2c] sm:$0xf]
    %v216 = vld [vmem:[#allocation7 + $0x30] sm:$0xf]
    %v217 = vld [vmem:[#allocation7 + $0x34] sm:$0xf]
    %v218 = vld [vmem:[#allocation7 + $0x38] sm:$0xf]
    %v219 = vld [vmem:[#allocation7 + $0x3c] sm:$0xf]
    %v220 = vld [vmem:[%s6] sm:$0x1]
    %v222 = vperm.slane %v220, 0
    %v240 = vunpack.c.l.b16 %v204
    %v241 = vunpack.c.l.b16 %v205
    %v242 = vunpack.c.l.b16 %v206
    %v243 = vunpack.c.l.b16 %v207
    %v244 = vunpack.c.l.b16 %v208
    %v245 = vunpack.c.l.b16 %v209
    %v246 = vunpack.c.l.b16 %v210
    %v247 = vunpack.c.l.b16 %v211
    %v248 = vunpack.c.l.b16 %v212
    %v249 = vunpack.c.l.b16 %v213
    %v250 = vunpack.c.l.b16 %v214
    %v251 = vunpack.c.l.b16 %v215
    %v252 = vunpack.c.l.b16 %v216
    %v253 = vunpack.c.l.b16 %v217
    %v254 = vunpack.c.l.b16 %v218
    %v255 = vunpack.c.l.b16 %v219
    %v256 = vpack.c.b16 %v241, %v240
    %v257 = vpack.c.b16 %v243, %v242
    %v258 = vpack.c.b16 %v245, %v244
    %v259 = vpack.c.b16 %v247, %v246
    %v260 = vpack.c.b16 %v249, %v248
    %v261 = vpack.c.b16 %v251, %v250
    %v262 = vpack.c.b16 %v253, %v252
    %v263 = vpack.c.b16 %v255, %v254
    %272 = vmatpush.bf16.msra.mxu0 %v263
    %273 = vmatpush.bf16.msra.mxu0 %v262
    %274 = vmatpush.bf16.msra.mxu0 %v261
    %275 = vmatpush.bf16.msra.mxu0 %v260
    %276 = vmatpush.bf16.msra.mxu0 %v259
    %277 = vmatpush.bf16.msra.mxu0 %v258
    %278 = vmatpush.bf16.msra.mxu0 %v257
    %279 = vmatpush.bf16.msra.mxu0 %v256
    %280 = vmatmul.bf16.gmra.mxu0 %v203
    %v281 = vpop.f32.mrf.mxu0
    %v282 = vadd.f32 %v222, %v281
    %v283 = vpop.f32.mrf.mxu0
    %284 = vdwg.mxu0
    %285 = vst [vmem:[%s7] sm:$0xff] %v282
    // Predicated region
    $region46: #{_dqn_forward_impl.1} parent=1 // pred_check
      _
    $region47: #{_dqn_forward_impl.1} parent=1 // pred_check_branch
      %287 = sbr.rel (0) target = $region49
    $region48: #{_dqn_forward_impl.1} parent=1 // pred_region
      _
    $region49: #{_dqn_forward_impl.1} parent=1 // pred_fallthru
      _
    // Predicated region
    $region50: #{_dqn_forward_impl.1} parent=1 // pred_check
      _
    $region51: #{_dqn_forward_impl.1} parent=1 // pred_check_branch
      %289 = sbr.rel (0) target = $region53
    $region52: #{_dqn_forward_impl.1} parent=1 // pred_region
      _
    $region53: #{_dqn_forward_impl.1} parent=1 // pred_fallthru
      _
    %290 = vsyncpa [#allocation3], 1
    %291 = vsyncpa [#allocation5], 1
    %292 = vsyncpa [#allocation8], 1

</llo_original>
